<compile_context>
chip_gen: v7x
topology: tpu7x:2x2x1
jax: 0.10.0
libtpu: 0.0.40
codegen_flags: <defaults>
</compile_context>

<pallas_src>
import numpy as np
import jax
import jax.numpy as jnp
from jax.experimental import pallas as pl
from jax.experimental.pallas import tpu as pltpu


def _round_up(n, m):
    return ((n + m - 1) // m) * m


# ---------------------------------------------------------------------------
# Kernel
# ---------------------------------------------------------------------------
def decompose_linear_kernel(x_ref, w1t_ref, w2t_ref, bias_ref, o_ref):
    # x_ref:    (TILE_M, in_p)    activation tile (streamed)
    # w1t_ref:  (in_p, rank_p)    = V.weight.T @ diag(sigma)   (resident)
    # w2t_ref:  (rank_p, out_p)   = (U.weight * U.mask).T      (resident)
    # bias_ref: (1, out_p)        f32 bias                     (resident)
    x = x_ref[...]
    # h = x @ vs  -- RHS contracted on its leading dim (MXU-friendly, no relayout)
    h = jnp.dot(x, w1t_ref[...], preferred_element_type=jnp.float32)
    # Round h back to the compute dtype between the two matmuls (PyTorch
    # chained-linear semantics; exact no-op for f32 inputs).
    h = h.astype(x.dtype)
    # out = h @ (U.weight * U.mask).T + U.bias
    out = jnp.dot(h, w2t_ref[...], preferred_element_type=jnp.float32)
    o_ref[...] = (out + bias_ref[...]).astype(o_ref.dtype)


# ---------------------------------------------------------------------------
# One-time parameter preparation (hoisted out of the per-call forward)
# ---------------------------------------------------------------------------
def prepare_decompose_linear_params(v_weight, sigma, u_weight, u_mask, u_bias,
                                     *, compute_dtype=None):
    """Fold, transpose and (conditionally) pad the DecomposeLinear parameters.

    Call once (module init / cached); the per-call forward then only streams
    activations.  `compute_dtype=jnp.bfloat16` is an explicit opt-in that
    halves the HBM bytes of the dominant x/out streams (f32 accumulation is
    kept inside the kernel) -- a numerics tradeoff, not a silent default.
    """
    rank, in_features = v_weight.shape
    out_features = u_weight.shape[0]
    dtype = jnp.dtype(compute_dtype) if compute_dtype is not None else v_weight.dtype

    # vs = V.weight.T @ diag(sigma)   -> (in_features, rank)
    w1t = (v_weight * sigma.reshape(rank, 1)).T.astype(dtype)
    # (U.weight * U.mask).T           -> (rank, out_features)
    w2t = (u_weight * u_mask).T.astype(dtype)
    bias = u_bias.astype(jnp.float32).reshape(1, out_features)

    # Conditional lane padding: only when a dim is not already 128-aligned.
    in_p = _round_up(in_features, 128)
    out_p = _round_up(out_features, 128)
    rank_p = _round_up(rank, 128)   # next 128-multiple only (never align to 256)

    if (in_p, rank_p) != (in_features, rank):
        w1t = jnp.zeros((in_p, rank_p), dtype).at[:in_features, :rank].set(w1t)
    if (rank_p, out_p) != (rank, out_features):
        w2t = jnp.zeros((rank_p, out_p), dtype).at[:rank, :out_features].set(w2t)
    if out_p != out_features:
        bias = jnp.zeros((1, out_p), jnp.float32).at[:, :out_features].set(bias)

    return {
        "w1t": w1t, "w2t": w2t, "bias": bias,
        "in_features": in_features, "out_features": out_features, "rank": rank,
        "in_p": in_p, "out_p": out_p, "rank_p": rank_p,
    }


# ---------------------------------------------------------------------------
# VMEM budgeting / tile selection
# ---------------------------------------------------------------------------
def _vmem_budget_bytes():
    try:
        cap = int(pltpu.get_tpu_info().vmem_capacity_bytes)
    except Exception:
        cap = 64 * 1024 * 1024          # conservative (v7x-sized) fallback
    # Leave compiler headroom; ~100 MiB on 128 MiB parts (v5e/v6e), ~56 MiB on v7x.
    return min(cap - 8 * 1024 * 1024, 100 * 1024 * 1024)


def _vmem_footprint(tm, in_p, rank_p, out_p, x_bytes, w_bytes):
    stream = 2 * tm * (in_p + out_p) * x_bytes                 # double-buffered x / out tiles
    resident = 2 * ((in_p + out_p) * rank_p * w_bytes + out_p * 4)
    internal = tm * rank_p * (4 + x_bytes) + tm * out_p * 4    # h (f32 + cast) and f32 out temps
    return stream + resident + internal


def _pick_tile_m(M, in_p, rank_p, out_p, x_bytes, w_bytes, budget):
    if M <= 8:
        return M
    # Guarantee >= 2 grid steps so the "parallel" axis shards across both v7x
    # TensorCores; on v5e/v6e (1 TC) the extra step costs ~0.35 us -> noise.
    tm = min(1024, _round_up(pl.cdiv(M, 2), 8))
    while tm > 8 and _vmem_footprint(tm, in_p, rank_p, out_p, x_bytes, w_bytes) > budget:
        tm = max(8, _round_up(tm // 2, 8))
    return tm


# ---------------------------------------------------------------------------
# Forward (per-call path: only streams x)
# ---------------------------------------------------------------------------
def decompose_linear_forward(x, params, *, tile_m=None):
    """x: (..., in_features) -> (..., out_features). Same math as DecomposeLinear.forward."""
    w1t, w2t, bias = params["w1t"], params["w2t"], params["bias"]
    in_features = params["in_features"]
    out_features = params["out_features"]
    rank = params["rank"]
    in_p, out_p, rank_p = params["in_p"], params["out_p"], params["rank_p"]

    compute_dtype = w1t.dtype
    lead = x.shape[:-1]
    M = int(np.prod(lead)) if lead else 1
    x2d = x.reshape(M, in_features)
    if x2d.dtype != compute_dtype:
        x2d = x2d.astype(compute_dtype)
    if in_p != in_features:                      # conditional lane padding only
        x2d = jnp.zeros((M, in_p), compute_dtype).at[:, :in_features].set(x2d)

    x_bytes = jnp.dtype(compute_dtype).itemsize
    w_bytes = jnp.dtype(w1t.dtype).itemsize
    budget = _vmem_budget_bytes()
    tm = tile_m if tile_m is not None else _pick_tile_m(
        M, in_p, rank_p, out_p, x_bytes, w_bytes, budget)
    grid = (pl.cdiv(M, tm),)                     # ragged edge handled by Pallas (no M padding)

    footprint = _vmem_footprint(tm, in_p, rank_p, out_p, x_bytes, w_bytes)
    vmem_limit = int(min(budget, max(2 * footprint, 16 * 1024 * 1024)))

    # Scheduler hint from TRUE (unpadded) dims.
    flops = 2 * M * rank * (in_features + out_features)
    bytes_accessed = (M * (in_features + out_features) * x_bytes
                      + rank * (in_features + out_features) * w_bytes
                      + out_features * 4)

    # NOTE: for very large out_features (>= ~8-16K, esp. on v7x) a second
    # "parallel" grid axis over out_p (TILE_N ~1-2K) would bound the per-step
    # footprint; not needed at these shapes.  Likewise pl.Buffered(1) on the
    # resident weight specs could reclaim a little VMEM on v7x.
    out2d = pl.pallas_call(
        decompose_linear_kernel,
        out_shape=jax.ShapeDtypeStruct((M, out_p), compute_dtype),
        grid_spec=pltpu.PrefetchScalarGridSpec(
            num_scalar_prefetch=0,
            grid=grid,
            in_specs=[
                pl.BlockSpec((tm, in_p), lambda i: (i, 0)),        # x: streamed per tile
                pl.BlockSpec((in_p, rank_p), lambda i: (0, 0)),    # w1t: resident
                pl.BlockSpec((rank_p, out_p), lambda i: (0, 0)),   # w2t: resident
                pl.BlockSpec((1, out_p), lambda i: (0, 0)),        # bias: resident
            ],
            out_specs=pl.BlockSpec((tm, out_p), lambda i: (i, 0)),
        ),
        compiler_params=pltpu.CompilerParams(
            dimension_semantics=("parallel",),
            vmem_limit_bytes=vmem_limit,
        ),
        cost_estimate=pl.CostEstimate(
            flops=flops, transcendentals=0, bytes_accessed=bytes_accessed),
    )(x2d, w1t, w2t, bias)

    if out_p != out_features:                    # conditional slice only
        out2d = out2d[:, :out_features]
    return out2d.reshape(*lead, out_features)


def decompose_linear(x, v_weight, sigma, u_weight, u_mask, u_bias, *,
                     tile_m=None, compute_dtype=None):
    """Convenience one-shot wrapper (prep + forward)."""
    params = prepare_decompose_linear_params(
        v_weight, sigma, u_weight, u_mask, u_bias, compute_dtype=compute_dtype)
    return decompose_linear_forward(x, params, tile_m=tile_m)


if __name__ == "__main__":
    # Small shapes consistent with wrapping an nn.Linear(in_features, out_features).
    batch, seq = 2, 8
    in_features, out_features = 32, 16
    rank = 8

    key = jax.random.PRNGKey(0)
    k_x, k_w, k_b = jax.random.split(key, 3)

    # Deterministic "original" linear layer parameters.
    W = jax.random.normal(k_w, (out_features, in_features), jnp.float32) * 0.1
    b = jax.random.normal(k_b, (out_features,), jnp.float32) * 0.1

    # SVD-based initialization (matches DecomposeLinear.__init__) -- one-time
    # parameter setup glue, done in numpy (not a kernel).
    U_np, S_np, Vt_np = np.linalg.svd(np.asarray(W), full_matrices=False)
    u_weight = jnp.asarray(U_np[:, :rank])                 # U.weight   (out_features, rank)
    sigma = jnp.asarray(S_np[:rank])                       # Sigma.diag (rank,)
    v_weight = jnp.asarray(Vt_np[:rank, :])                # V.weight   (rank, in_features)
    u_mask = jnp.ones((out_features, rank), jnp.float32)   # U.mask (all ones)
    u_bias = b                                             # U.bias

    x = jax.random.normal(k_x, (batch, seq, in_features), jnp.float32)

    # One-time parameter prep (hoisted), then per-call forward.
    params = prepare_decompose_linear_params(v_weight, sigma, u_weight, u_mask, u_bias)
    out = decompose_linear_forward(x, params)
    out = jax.block_until_ready(out)

    # Pure-JAX reference of the same forward math (sanity check).
    vs = v_weight.T @ jnp.diag(sigma)
    h_ref = x @ vs
    ref = h_ref @ (u_weight * u_mask).T + u_bias
    assert out.shape == (batch, seq, out_features)
    assert np.allclose(np.asarray(out), np.asarray(ref), atol=1e-4, rtol=1e-4)

    print("KERNEL_OK")
</pallas_src>

<mosaic_0001>
module attributes {stable_mosaic.version = 11 : i64} {
  func.func @decompose_linear_kernel(%arg0: i32, %arg1: memref<8x128xf32, #tpu.memory_space<vmem>>, %arg2: memref<128x128xf32, #tpu.memory_space<vmem>>, %arg3: memref<128x128xf32, #tpu.memory_space<vmem>>, %arg4: memref<1x128xf32, #tpu.memory_space<vmem>>, %arg5: memref<8x128xf32, #tpu.memory_space<vmem>>) attributes {dimension_semantics = [#tpu.dimension_semantics<parallel>], iteration_bounds = array<i64: 2>, scalar_prefetch = 0 : i64, scratch_operands = 0 : i64, tpu.core_type = #tpu.core_type<tc>, window_params = [{transform_indices = @transform_0, window_bounds = array<i64: 8, 128>}, {pipeline_mode = #tpu.pipeline_mode<synchronous>, transform_indices = @transform_1, window_bounds = array<i64: 128, 128>}, {pipeline_mode = #tpu.pipeline_mode<synchronous>, transform_indices = @transform_2, window_bounds = array<i64: 128, 128>}, {pipeline_mode = #tpu.pipeline_mode<synchronous>, transform_indices = @transform_3, window_bounds = array<i64: 1, 128>}, {transform_indices = @transform_4, window_bounds = array<i64: 8, 128>}]} {
    %c0 = arith.constant 0 : index
    %c0_0 = arith.constant 0 : index
    %0 = vector.load %arg1[%c0, %c0_0] : memref<8x128xf32, #tpu.memory_space<vmem>>, vector<8x128xf32>
    %c0_1 = arith.constant 0 : index
    %c0_2 = arith.constant 0 : index
    %1 = vector.load %arg2[%c0_1, %c0_2] : memref<128x128xf32, #tpu.memory_space<vmem>>, vector<128x128xf32>
    %cst = arith.constant dense<0.000000e+00> : vector<8x128xf32>
    %2 = tpu.matmul %0, %1, %cst {dimension_numbers = #tpu.dot_dimension_numbers<[1], [0], [0], [1], [0, 0, 1, 1], [], []>} : vector<8x128xf32>, vector<128x128xf32>, vector<8x128xf32> -> vector<8x128xf32>
    %c0_3 = arith.constant 0 : index
    %c0_4 = arith.constant 0 : index
    %3 = vector.load %arg3[%c0_3, %c0_4] : memref<128x128xf32, #tpu.memory_space<vmem>>, vector<128x128xf32>
    %cst_5 = arith.constant dense<0.000000e+00> : vector<8x128xf32>
    %4 = tpu.matmul %2, %3, %cst_5 {dimension_numbers = #tpu.dot_dimension_numbers<[1], [0], [0], [1], [0, 0, 1, 1], [], []>} : vector<8x128xf32>, vector<128x128xf32>, vector<8x128xf32> -> vector<8x128xf32>
    %c0_6 = arith.constant 0 : index
    %c0_7 = arith.constant 0 : index
    %5 = vector.load %arg4[%c0_6, %c0_7] : memref<1x128xf32, #tpu.memory_space<vmem>>, vector<1x128xf32>
    %6 = vector.broadcast %5 : vector<1x128xf32> to vector<8x128xf32>
    %7 = arith.addf %4, %6 : vector<8x128xf32>
    %c0_8 = arith.constant 0 : index
    %c0_9 = arith.constant 0 : index
    %8 = vector.load %arg5[%c0_8, %c0_9] : memref<8x128xf32, #tpu.memory_space<vmem>>, vector<8x128xf32>
    tpu.vector_store %arg5[%c0_8, %c0_9], %7 {strides = array<i32>} : memref<8x128xf32, #tpu.memory_space<vmem>>, vector<8x128xf32>,
    return
  }
  func.func @transform_0(%arg0: i32) -> (i32, i32) {
    %c0_i32 = arith.constant 0 : i32
    %c0_i32_0 = arith.constant 0 : i32
    return %arg0, %c0_i32 : i32, i32
  }
  func.func @transform_1(%arg0: i32) -> (i32, i32) {
    %c0_i32 = arith.constant 0 : i32
    %c0_i32_0 = arith.constant 0 : i32
    %c0_i32_1 = arith.constant 0 : i32
    return %c0_i32, %c0_i32_0 : i32, i32
  }
  func.func @transform_2(%arg0: i32) -> (i32, i32) {
    %c0_i32 = arith.constant 0 : i32
    %c0_i32_0 = arith.constant 0 : i32
    %c0_i32_1 = arith.constant 0 : i32
    return %c0_i32, %c0_i32_0 : i32, i32
  }
  func.func @transform_3(%arg0: i32) -> (i32, i32) {
    %c0_i32 = arith.constant 0 : i32
    %c0_i32_0 = arith.constant 0 : i32
    %c0_i32_1 = arith.constant 0 : i32
    return %c0_i32, %c0_i32_0 : i32, i32
  }
  func.func @transform_4(%arg0: i32) -> (i32, i32) {
    %c0_i32 = arith.constant 0 : i32
    %c0_i32_0 = arith.constant 0 : i32
    return %arg0, %c0_i32 : i32, i32
  }
}

</mosaic_0001>

<llo_original>
// kernel: tpu_custom_call.1
$region0: #{tpu_custom_call.1}
  #allocation0 [shape = 'u32[]', space=smem, size = 0x4, offset = 0x4, fixed_abs, tag = 'smem constant byte address 0x4 - core index']
  #allocation1 [shape = 'u32[144,128]{1,0:T(1,128)}', space=vmem, size = 0x12000, scoped, tag = 'internal scratch']
  %s0 = inlined_call_operand.hbm [shape: f32[16,128], index: 0, kind: input, shape index: {}]
  %s1 = inlined_call_operand.hbm [shape: f32[128,128], index: 1, kind: input, shape index: {}]
  %s2 = inlined_call_operand.hbm [shape: f32[128,128], index: 2, kind: input, shape index: {}]
  %s3 = inlined_call_operand.vmem [shape: f32[1,128], index: 3, kind: input, shape index: {}]
  %s4 = inlined_call_operand.hbm [shape: f32[16,128], index: 4, kind: output, shape index: {}]
  %s5 = sld [smem:[#allocation0]]
  $region61: #{tpu_custom_call.1} parent=0
    _
  %s7 = ssub.s32 1, %s5
  %s8 = scalar_select 0, %s7, %s5
  $region1: #{tpu_custom_call.1} parent=0
    #allocation2 [shape = 'u8[8192]{0}', space=vmem, size = 0x2000, scoped, tag = 'input window, operand 0']
    #allocation3 [shape = 's32[2]{0}', space=sflag, size = 0x8, scoped, tag = 'scoped memory for tpu_custom_call.1']
    #allocation4 [shape = 's32[2]{0}', space=sflag, size = 0x8, scoped, tag = 'scoped memory for tpu_custom_call.1']
    #allocation5 [shape = 'u8[65536]{0}', space=vmem, size = 0x10000, scoped, tag = 'input window, operand 1, single buffered']
    #allocation6 [shape = 's32[1]{0}', space=sflag, size = 0x4, scoped, tag = 'scoped memory for tpu_custom_call.1']
    #allocation7 [shape = 'u8[65536]{0}', space=vmem, size = 0x10000, scoped, tag = 'input window, operand 2, single buffered']
    #allocation8 [shape = 'u8[8192]{0}', space=vmem, size = 0x2000, scoped, tag = 'output window, operand 0']
    %9 = vsyncpa [#allocation3], 0
    %s10 = scalar_lea.sflag [#allocation3], 1
    %11 = vsyncpa %s10, 0
    %12 = vsyncpa [#allocation6], 0
    %13 = vsyncpa [#allocation4], 0
    %s14 = scalar_lea.sflag [#allocation4], 1
    %15 = vsyncpa %s14, 0
    loop: start=0, step=1, limit=4
    $region2: #{tpu_custom_call.1} parent=1 // loop_pre_header
      _
    $region3: #{tpu_custom_call.1} parent=1 // loop_header
      %s17 = sphi 0, %s21
      %p18 = scmp.ge.s32.totalorder %s17, 4
      %s27 = sphi 0, %s29
      %s30 = sphi 0, %s27
      %s31 = sphi 0, %s30
      %s47 = sphi 0, %s31
      %s51 = sphi 0, %s51
      %s53 = sphi 0, %s51
      %s54 = sphi 0, %s53
      %s68 = sphi 0, %s54
      %s72 = sphi 0, %s72
      %s74 = sphi 0, %s72
      %s75 = sphi 0, %s74
      %s89 = sphi 0, %s75
      %s93 = sphi 0, %s93
      %s95 = sphi 0, %s93
      %s96 = sphi 0, %s95
      %s110 = sphi 0, %s96
      %s116 = sphi 0, %s118
      %s119 = sphi 0, %s116
      %s120 = sphi 0, %s119
      %s136 = sphi 0, %s120
    $region4: #{tpu_custom_call.1} parent=1 // loop_header_branch
      %20 = sbr.rel (%p18) target = $region8
    $region5: #{tpu_custom_call.1} parent=1 // loop_body
      %s22 = ssub.s32 %s17, 1
      %s23 = ssub.s32 %s17, 2
      %s24 = sadd.s32 %s17, 1
      %s25 = ssub.s32 %s17, %s24
      %p26 = scmp.eq.s32.totalorder %s25, 0
      %s28 = sadd.s32 %s27, 1
      %s29 = scalar_select %p26, %s27, %s28
      %p32 = pneg %p26
      %p33 = scmp.eq.s32.totalorder %s17, 1
      %p34 = por %p32, %p33
      %p35 = scmp.ne.s32.totalorder %s27, %s30
      %p36 = scmp.eq.s32.totalorder %s17, 0
      %p37 = por %p35, %p36
      %p38 = scmp.ne.s32.totalorder %s27, %s30
      %p39 = scmp.eq.s32.totalorder %s22, 1
      %p40 = por %p38, %p39
      %p41 = scmp.ne.s32.totalorder %s30, %s31
      %p42 = scmp.eq.s32.totalorder %s22, 0
      %p43 = por %p41, %p42
      %p44 = scmp.ne.s32.totalorder %s30, %s31
      %p45 = scmp.eq.s32.totalorder %s23, 1
      %p46 = por %p44, %p45
      %p48 = scmp.ne.s32.totalorder %s31, %s47
      %p49 = scmp.eq.s32.totalorder %s23, 0
      %p50 = por %p48, %p49
      %s52 = sadd.s32 %s51, 1
      %p55 = scmp.eq.s32.totalorder %s17, 1
      %p56 = scmp.ne.s32.totalorder %s51, %s53
      %p57 = scmp.eq.s32.totalorder %s17, 0
      %p58 = por %p56, %p57
      %p59 = scmp.ne.s32.totalorder %s51, %s53
      %p60 = scmp.eq.s32.totalorder %s22, 1
      %p61 = por %p59, %p60
      %p62 = scmp.ne.s32.totalorder %s53, %s54
      %p63 = scmp.eq.s32.totalorder %s22, 0
      %p64 = por %p62, %p63
      %p65 = scmp.ne.s32.totalorder %s53, %s54
      %p66 = scmp.eq.s32.totalorder %s23, 1
      %p67 = por %p65, %p66
      %p69 = scmp.ne.s32.totalorder %s54, %s68
      %p70 = scmp.eq.s32.totalorder %s23, 0
      %p71 = por %p69, %p70
      %s73 = sadd.s32 %s72, 1
      %p76 = scmp.eq.s32.totalorder %s17, 1
      %p77 = scmp.ne.s32.totalorder %s72, %s74
      %p78 = scmp.eq.s32.totalorder %s17, 0
      %p79 = por %p77, %p78
      %p80 = scmp.ne.s32.totalorder %s72, %s74
      %p81 = scmp.eq.s32.totalorder %s22, 1
      %p82 = por %p80, %p81
      %p83 = scmp.ne.s32.totalorder %s74, %s75
      %p84 = scmp.eq.s32.totalorder %s22, 0
      %p85 = por %p83, %p84
      %p86 = scmp.ne.s32.totalorder %s74, %s75
      %p87 = scmp.eq.s32.totalorder %s23, 1
      %p88 = por %p86, %p87
      %p90 = scmp.ne.s32.totalorder %s75, %s89
      %p91 = scmp.eq.s32.totalorder %s23, 0
      %p92 = por %p90, %p91
      %s94 = sadd.s32 %s93, 1
      %p97 = scmp.eq.s32.totalorder %s17, 1
      %p98 = scmp.ne.s32.totalorder %s93, %s95
      %p99 = scmp.eq.s32.totalorder %s17, 0
      %p100 = por %p98, %p99
      %p101 = scmp.ne.s32.totalorder %s93, %s95
      %p102 = scmp.eq.s32.totalorder %s22, 1
      %p103 = por %p101, %p102
      %p104 = scmp.ne.s32.totalorder %s95, %s96
      %p105 = scmp.eq.s32.totalorder %s22, 0
      %p106 = por %p104, %p105
      %p107 = scmp.ne.s32.totalorder %s95, %s96
      %p108 = scmp.eq.s32.totalorder %s23, 1
      %p109 = por %p107, %p108
      %p111 = scmp.ne.s32.totalorder %s96, %s110
      %p112 = scmp.eq.s32.totalorder %s23, 0
      %p113 = por %p111, %p112
      %s114 = ssub.s32 %s17, %s24
      %p115 = scmp.eq.s32.totalorder %s114, 0
      %s117 = sadd.s32 %s116, 1
      %s118 = scalar_select %p115, %s116, %s117
      %p121 = pneg %p115
      %p122 = scmp.eq.s32.totalorder %s17, 1
      %p123 = por %p121, %p122
      %p124 = scmp.ne.s32.totalorder %s116, %s119
      %p125 = scmp.eq.s32.totalorder %s17, 0
      %p126 = por %p124, %p125
      %p127 = scmp.ne.s32.totalorder %s116, %s119
      %p128 = scmp.eq.s32.totalorder %s22, 1
      %p129 = por %p127, %p128
      %p130 = scmp.ne.s32.totalorder %s119, %s120
      %p131 = scmp.eq.s32.totalorder %s22, 0
      %p132 = por %p130, %p131
      %p133 = scmp.ne.s32.totalorder %s119, %s120
      %p134 = scmp.eq.s32.totalorder %s23, 1
      %p135 = por %p133, %p134
      %p137 = scmp.ne.s32.totalorder %s120, %s136
      %p138 = scmp.eq.s32.totalorder %s23, 0
      %p139 = por %p137, %p138
      %p140 = scmp.le.s32.totalorder 1, %s17
      %p141 = scmp.lt.s32.totalorder %s17, 3
      %p142 = pnand %p140, %p141
      %p143 = pneg %p142
      // Predicated region
      $region9: #{tpu_custom_call.1} parent=5 // pred_check
        _
      $region10: #{tpu_custom_call.1} parent=5 // pred_check_branch
        %145 = sbr.rel (%p142) target = $region12
      $region11: #{tpu_custom_call.1} parent=5 // pred_region
        %s146 = ssub.s32 %s17, 1
        // Predicated region
        $region13: #{tpu_custom_call.1} parent=11 // pred_check
          %p147 = pneg %p64
        $region14: #{tpu_custom_call.1} parent=11 // pred_check_branch
          %149 = sbr.rel (%p147) target = $region16
        $region15: #{tpu_custom_call.1} parent=11 // pred_region
          %s151 = ssub.s32 2048, 2048
          %152 = vsyncadd [#allocation6], %s151
          %s153 = sshll.u32 [#allocation5], 4
          %s154 = int_to_ptr.vmem [resolvable:$true] %s153
          %159 = dma.hbm_to_vmem [thread:$0]  %s1, 2048, %s154, [#allocation6], 128, 128, 8
        $region16: #{tpu_custom_call.1} parent=11 // pred_fallthru
          _
        // Predicated region
        $region17: #{tpu_custom_call.1} parent=11 // pred_check
          %p160 = pneg %p85
        $region18: #{tpu_custom_call.1} parent=11 // pred_check_branch
          %162 = sbr.rel (%p160) target = $region20
        $region19: #{tpu_custom_call.1} parent=11 // pred_region
          %s164 = ssub.s32 2048, 2048
          %165 = vsyncadd [#allocation6], %s164
          %s166 = sshll.u32 [#allocation7], 4
          %s167 = int_to_ptr.vmem [resolvable:$true] %s166
          %172 = dma.hbm_to_vmem [thread:$0]  %s2, 2048, %s167, [#allocation6], 128, 128, 8
        $region20: #{tpu_custom_call.1} parent=11 // pred_fallthru
          _
        // Predicated region
        $region21: #{tpu_custom_call.1} parent=11 // pred_check
          %p173 = pneg %p106
        $region22: #{tpu_custom_call.1} parent=11 // pred_check_branch
          %175 = sbr.rel (%p173) target = $region24
        $region23: #{tpu_custom_call.1} parent=11 // pred_region
          _
        $region24: #{tpu_custom_call.1} parent=11 // pred_fallthru
          _
      $region12: #{tpu_custom_call.1} parent=5 // pred_fallthru
        _
      %p176 = scmp.lt.s32.totalorder %s17, 2
      // Predicated region
      $region25: #{tpu_custom_call.1} parent=5 // pred_check
        %p177 = pneg %p176
      $region26: #{tpu_custom_call.1} parent=5 // pred_check_branch
        %179 = sbr.rel (%p177) target = $region28
      $region27: #{tpu_custom_call.1} parent=5 // pred_region
        // Predicated region
        $region29: #{tpu_custom_call.1} parent=27 // pred_check
          %p180 = pneg %p37
        $region30: #{tpu_custom_call.1} parent=27 // pred_check_branch
          %182 = sbr.rel (%p180) target = $region32
        $region31: #{tpu_custom_call.1} parent=27 // pred_region
          %s183 = sand.u32 %s27, 1
          %s184 = scalar_lea.sflag [#allocation3], %s183
          %s185 = sand.u32 %s27, 1
          %s186 = smul.addr %s185, 8
          %s187 = scalar_lea.vmem [#allocation2], %s186
          %s189 = ssub.s32 128, 128
          %190 = vsyncadd %s184, %s189
          %s191 = smul.addr %s17, 128
          %s192 = scalar_lea.hbm %s0, %s191
          %s194 = sshll.u32 %s187, 4
          %s195 = int_to_ptr.vmem [resolvable:$true] %s194
          %197 = dma.hbm_to_vmem [thread:$0]  %s192, 128, %s195, %s184
        $region32: #{tpu_custom_call.1} parent=27 // pred_fallthru
          _
      $region28: #{tpu_custom_call.1} parent=5 // pred_fallthru
        _
      %p198 = scmp.le.s32.totalorder 1, %s17
      %p199 = scmp.lt.s32.totalorder %s17, 3
      %p200 = pnand %p198, %p199
      %p201 = pneg %p200
      // Predicated region
      $region33: #{tpu_custom_call.1} parent=5 // pred_check
        _
      $region34: #{tpu_custom_call.1} parent=5 // pred_check_branch
        %203 = sbr.rel (%p200) target = $region36
      $region35: #{tpu_custom_call.1} parent=5 // pred_region
        %s204 = ssub.s32 %s17, 1
        %s205 = sand.u32 %s30, 1
        %s206 = scalar_lea.sflag [#allocation3], %s205
        %s207 = sand.u32 %s30, 1
        %s208 = smul.addr %s207, 8
        %s209 = scalar_lea.vmem [#allocation2], %s208
        // Predicated region
        $region37: #{tpu_custom_call.1} parent=35 // pred_check
          %p210 = pneg %p43
        $region38: #{tpu_custom_call.1} parent=35 // pred_check_branch
          %212 = sbr.rel (%p210) target = $region40
        $region39: #{tpu_custom_call.1} parent=35 // pred_region
          %213 = dma.done %s206, 128
        $region40: #{tpu_custom_call.1} parent=35 // pred_fallthru
          _
        // Predicated region
        $region41: #{tpu_custom_call.1} parent=35 // pred_check
          %p214 = pneg %p64
        $region42: #{tpu_custom_call.1} parent=35 // pred_check_branch
          %216 = sbr.rel (%p214) target = $region44
        $region43: #{tpu_custom_call.1} parent=35 // pred_region
          %217 = dma.done [#allocation6], 2048
        $region44: #{tpu_custom_call.1} parent=35 // pred_fallthru
          _
        // Predicated region
        $region45: #{tpu_custom_call.1} parent=35 // pred_check
          %p218 = pneg %p85
        $region46: #{tpu_custom_call.1} parent=35 // pred_check_branch
          %220 = sbr.rel (%p218) target = $region48
        $region47: #{tpu_custom_call.1} parent=35 // pred_region
          %221 = dma.done [#allocation6], 2048
        $region48: #{tpu_custom_call.1} parent=35 // pred_fallthru
          _
        %s222 = sand.u32 %s30, 1
        %s223 = scalar_lea.sflag [#allocation3], %s222
        %s224 = sand.u32 %s30, 1
        %s225 = smul.addr %s224, 8
        %s226 = scalar_lea.vmem [#allocation2], %s225
        %p227 = pneg %p43
        %p228 = pneg %p40
        %p229 = pneg %p64
        %p230 = pneg %p61
        %p231 = pneg %p85
        %p232 = pneg %p82
        %p233 = pneg %p106
        %p234 = pneg %p103
        %p235 = pneg %p132
        %p236 = pneg %p129
        %s237 = sand.u32 %s119, 1
        %s238 = scalar_lea.sflag [#allocation4], %s237
        %s239 = sand.u32 %s119, 1
        %s240 = smul.addr %s239, 8
        %s241 = scalar_lea.vmem [#allocation8], %s240
        %v242 = vld [vmem:[%s209] sm:$0xff]
        %v243 = vld [vmem:[#allocation5] sm:$0xff]
        %v244 = vld [vmem:[#allocation5 + $0x8] sm:$0xff]
        %v245 = vld [vmem:[#allocation5 + $0x10] sm:$0xff]
        %v246 = vld [vmem:[#allocation5 + $0x18] sm:$0xff]
        %v247 = vld [vmem:[#allocation5 + $0x20] sm:$0xff]
        %v248 = vld [vmem:[#allocation5 + $0x28] sm:$0xff]
        %v249 = vld [vmem:[#allocation5 + $0x30] sm:$0xff]
        %v250 = vld [vmem:[#allocation5 + $0x38] sm:$0xff]
        %v251 = vld [vmem:[#allocation5 + $0x40] sm:$0xff]
        %v252 = vld [vmem:[#allocation5 + $0x48] sm:$0xff]
        %v253 = vld [vmem:[#allocation5 + $0x50] sm:$0xff]
        %v254 = vld [vmem:[#allocation5 + $0x58] sm:$0xff]
        %v255 = vld [vmem:[#allocation5 + $0x60] sm:$0xff]
        %v256 = vld [vmem:[#allocation5 + $0x68] sm:$0xff]
        %v257 = vld [vmem:[#allocation5 + $0x70] sm:$0xff]
        %v258 = vld [vmem:[#allocation5 + $0x78] sm:$0xff]
        %259 = vmatprep.subr.mxu0 0.0
        %260 = vmatpush1.msra.mxu0 %v243
        %261 = vmatprep.subr.mxu0 0.0
        %262 = vmatpush1.msra.mxu0 %v244
        %263 = vmatprep.subr.mxu0 0.0
        %264 = vmatpush1.msra.mxu0 %v245
        %265 = vmatprep.subr.mxu0 0.0
        %266 = vmatpush1.msra.mxu0 %v246
        %267 = vmatprep.subr.mxu0 0.0
        %268 = vmatpush1.msra.mxu0 %v247
        %269 = vmatprep.subr.mxu0 0.0
        %270 = vmatpush1.msra.mxu0 %v248
        %271 = vmatprep.subr.mxu0 0.0
        %272 = vmatpush1.msra.mxu0 %v249
        %273 = vmatprep.subr.mxu0 0.0
        %274 = vmatpush1.msra.mxu0 %v250
        %275 = vmatprep.subr.mxu0 0.0
        %276 = vmatpush1.msra.mxu0 %v251
        %277 = vmatprep.subr.mxu0 0.0
        %278 = vmatpush1.msra.mxu0 %v252
        %279 = vmatprep.subr.mxu0 0.0
        %280 = vmatpush1.msra.mxu0 %v253
        %281 = vmatprep.subr.mxu0 0.0
        %282 = vmatpush1.msra.mxu0 %v254
        %283 = vmatprep.subr.mxu0 0.0
        %284 = vmatpush1.msra.mxu0 %v255
        %285 = vmatprep.subr.mxu0 0.0
        %286 = vmatpush1.msra.mxu0 %v256
        %287 = vmatprep.subr.mxu0 0.0
        %288 = vmatpush1.msra.mxu0 %v257
        %289 = vmatprep.subr.mxu0 0.0
        %290 = vmatpush1.msra.mxu0 %v258
        %291 = vmatprep.subr.mxu0 0.0
        %292 = vmatpush1.msra.mxu0 0.0
        %293 = vmatprep.subr.mxu0 0.0
        %294 = vmatpush1.msra.mxu0 0.0
        %295 = vmatprep.subr.mxu0 0.0
        %296 = vmatpush1.msra.mxu0 0.0
        %297 = vmatprep.subr.mxu0 0.0
        %298 = vmatpush1.msra.mxu0 0.0
        %299 = vmatprep.subr.mxu0 0.0
        %300 = vmatpush1.msra.mxu0 0.0
        %301 = vmatprep.subr.mxu0 0.0
        %302 = vmatpush1.msra.mxu0 0.0
        %303 = vmatprep.subr.mxu0 0.0
        %304 = vmatpush1.msra.mxu0 0.0
        %305 = vmatprep.subr.mxu0 0.0
        %306 = vmatpush1.msra.mxu0 0.0
        %307 = vmatprep.subr.mxu0 0.0
        %308 = vmatpush1.msra.mxu0 0.0
        %309 = vmatprep.subr.mxu0 0.0
        %310 = vmatpush1.msra.mxu0 0.0
        %311 = vmatprep.subr.mxu0 0.0
        %312 = vmatpush1.msra.mxu0 0.0
        %313 = vmatprep.subr.mxu0 0.0
        %314 = vmatpush1.msra.mxu0 0.0
        %315 = vmatprep.subr.mxu0 0.0
        %316 = vmatpush1.msra.mxu0 0.0
        %317 = vmatprep.subr.mxu0 0.0
        %318 = vmatpush1.msra.mxu0 0.0
        %319 = vmatprep.subr.mxu0 0.0
        %320 = vmatpush1.msra.mxu0 0.0
        %321 = vmatprep.subr.mxu0 0.0
        %322 = vmatpush1.msra.mxu0 0.0
        %323 = vmatprep.mubr.f32.mxu0 0.0
        %324 = vmatmul.mubr.f32.gmra.mrb[0].mxu0 %v242
        %v325 = vpop.f32.mrb[0].mxu0
        %v326 = vadd.f32 0.0, %v325
        %v327 = vpop.f32.mrb[0].mxu0
        %328 = vdwg.mxu0
        %v329 = vld [vmem:[#allocation7] sm:$0xff]
        %v330 = vld [vmem:[#allocation7 + $0x8] sm:$0xff]
        %v331 = vld [vmem:[#allocation7 + $0x10] sm:$0xff]
        %v332 = vld [vmem:[#allocation7 + $0x18] sm:$0xff]
        %v333 = vld [vmem:[#allocation7 + $0x20] sm:$0xff]
        %v334 = vld [vmem:[#allocation7 + $0x28] sm:$0xff]
        %v335 = vld [vmem:[#allocation7 + $0x30] sm:$0xff]
        %v336 = vld [vmem:[#allocation7 + $0x38] sm:$0xff]
        %v337 = vld [vmem:[#allocation7 + $0x40] sm:$0xff]
        %v338 = vld [vmem:[#allocation7 + $0x48] sm:$0xff]
        %v339 = vld [vmem:[#allocation7 + $0x50] sm:$0xff]
        %v340 = vld [vmem:[#allocation7 + $0x58] sm:$0xff]
        %v341 = vld [vmem:[#allocation7 + $0x60] sm:$0xff]
        %v342 = vld [vmem:[#allocation7 + $0x68] sm:$0xff]
        %v343 = vld [vmem:[#allocation7 + $0x70] sm:$0xff]
        %v344 = vld [vmem:[#allocation7 + $0x78] sm:$0xff]
        %v345 = vld [vmem:[%s3] sm:$0x1]
        %v347 = vlaneseq
        %v348 = vshrl.u32 %v347, 7
        %v349 = vsub.s32 0, %v348
        %v350 = vrot.slane %v345, %v349
        %352 = vmatprep.subr.mxu0 0.0
        %353 = vmatpush1.msra.mxu0 %v329
        %354 = vmatprep.subr.mxu0 0.0
        %355 = vmatpush1.msra.mxu0 %v330
        %356 = vmatprep.subr.mxu0 0.0
        %357 = vmatpush1.msra.mxu0 %v331
        %358 = vmatprep.subr.mxu0 0.0
        %359 = vmatpush1.msra.mxu0 %v332
        %360 = vmatprep.subr.mxu0 0.0
        %361 = vmatpush1.msra.mxu0 %v333
        %362 = vmatprep.subr.mxu0 0.0
        %363 = vmatpush1.msra.mxu0 %v334
        %364 = vmatprep.subr.mxu0 0.0
        %365 = vmatpush1.msra.mxu0 %v335
        %366 = vmatprep.subr.mxu0 0.0
        %367 = vmatpush1.msra.mxu0 %v336
        %368 = vmatprep.subr.mxu0 0.0
        %369 = vmatpush1.msra.mxu0 %v337
        %370 = vmatprep.subr.mxu0 0.0
        %371 = vmatpush1.msra.mxu0 %v338
        %372 = vmatprep.subr.mxu0 0.0
        %373 = vmatpush1.msra.mxu0 %v339
        %374 = vmatprep.subr.mxu0 0.0
        %375 = vmatpush1.msra.mxu0 %v340
        %376 = vmatprep.subr.mxu0 0.0
        %377 = vmatpush1.msra.mxu0 %v341
        %378 = vmatprep.subr.mxu0 0.0
        %379 = vmatpush1.msra.mxu0 %v342
        %380 = vmatprep.subr.mxu0 0.0
        %381 = vmatpush1.msra.mxu0 %v343
        %382 = vmatprep.subr.mxu0 0.0
        %383 = vmatpush1.msra.mxu0 %v344
        %384 = vmatprep.subr.mxu0 0.0
        %385 = vmatpush1.msra.mxu0 0.0
        %386 = vmatprep.subr.mxu0 0.0
        %387 = vmatpush1.msra.mxu0 0.0
        %388 = vmatprep.subr.mxu0 0.0
        %389 = vmatpush1.msra.mxu0 0.0
        %390 = vmatprep.subr.mxu0 0.0
        %391 = vmatpush1.msra.mxu0 0.0
        %392 = vmatprep.subr.mxu0 0.0
        %393 = vmatpush1.msra.mxu0 0.0
        %394 = vmatprep.subr.mxu0 0.0
        %395 = vmatpush1.msra.mxu0 0.0
        %396 = vmatprep.subr.mxu0 0.0
        %397 = vmatpush1.msra.mxu0 0.0
        %398 = vmatprep.subr.mxu0 0.0
        %399 = vmatpush1.msra.mxu0 0.0
        %400 = vmatprep.subr.mxu0 0.0
        %401 = vmatpush1.msra.mxu0 0.0
        %402 = vmatprep.subr.mxu0 0.0
        %403 = vmatpush1.msra.mxu0 0.0
        %404 = vmatprep.subr.mxu0 0.0
        %405 = vmatpush1.msra.mxu0 0.0
        %406 = vmatprep.subr.mxu0 0.0
        %407 = vmatpush1.msra.mxu0 0.0
        %408 = vmatprep.subr.mxu0 0.0
        %409 = vmatpush1.msra.mxu0 0.0
        %410 = vmatprep.subr.mxu0 0.0
        %411 = vmatpush1.msra.mxu0 0.0
        %412 = vmatprep.subr.mxu0 0.0
        %413 = vmatpush1.msra.mxu0 0.0
        %414 = vmatprep.subr.mxu0 0.0
        %415 = vmatpush1.msra.mxu0 0.0
        %416 = vmatprep.mubr.f32.mxu0 0.0
        %417 = vmatmul.mubr.f32.gmra.mrb[0].mxu0 %v326
        %v418 = vpop.f32.mrb[0].mxu0
        %v419 = vadd.f32 %v350, %v418
        %v420 = vpop.f32.mrb[0].mxu0
        %421 = vdwg.mxu0
        %422 = vst [vmem:[%s241] sm:$0xff] %v419
        %s423 = sand.u32 %s119, 1
        %s424 = scalar_lea.sflag [#allocation4], %s423
        %s425 = sand.u32 %s119, 1
        %s426 = smul.addr %s425, 8
        %s427 = scalar_lea.vmem [#allocation8], %s426
        // Predicated region
        $region49: #{tpu_custom_call.1} parent=35 // pred_check
          %p428 = pneg %p129
        $region50: #{tpu_custom_call.1} parent=35 // pred_check_branch
          %430 = sbr.rel (%p428) target = $region52
        $region51: #{tpu_custom_call.1} parent=35 // pred_region
          %s432 = ssub.s32 128, 128
          %433 = vsyncadd %s424, %s432
          %s434 = smul.addr %s22, 128
          %s435 = scalar_lea.hbm %s4, %s434
          %s437 = sshll.u32 %s427, 4
          %s438 = int_to_ptr.vmem [resolvable:$true] %s437
          %440 = dma.vmem_to_hbm [thread:$0]  %s438, 128, %s435, %s424
        $region52: #{tpu_custom_call.1} parent=35 // pred_fallthru
          _
      $region36: #{tpu_custom_call.1} parent=5 // pred_fallthru
        _
      %p441 = scmp.le.s32.totalorder 2, %s17
      // Predicated region
      $region53: #{tpu_custom_call.1} parent=5 // pred_check
        %p442 = pneg %p441
      $region54: #{tpu_custom_call.1} parent=5 // pred_check_branch
        %444 = sbr.rel (%p442) target = $region56
      $region55: #{tpu_custom_call.1} parent=5 // pred_region
        %s445 = ssub.s32 %s17, 2
        // Predicated region
        $region57: #{tpu_custom_call.1} parent=55 // pred_check
          %p446 = pneg %p135
        $region58: #{tpu_custom_call.1} parent=55 // pred_check_branch
          %448 = sbr.rel (%p446) target = $region60
        $region59: #{tpu_custom_call.1} parent=55 // pred_region
          %s449 = sand.u32 %s120, 1
          %s450 = scalar_lea.sflag [#allocation4], %s449
          %s451 = sand.u32 %s120, 1
          %s452 = smul.addr %s451, 8
          %s453 = scalar_lea.vmem [#allocation8], %s452
          %454 = dma.done %s450, 128
        $region60: #{tpu_custom_call.1} parent=55 // pred_fallthru
          _
      $region56: #{tpu_custom_call.1} parent=5 // pred_fallthru
        _
    $region6: #{tpu_custom_call.1} parent=1 // loop_footer
      %s21 = sadd.s32 1, %s17
    $region7: #{tpu_custom_call.1} parent=1 // loop_footer_branch
      %16 = sbr.rel target = $region3
    $region8: #{tpu_custom_call.1} parent=1 // loop_exit
      _
    %455 = vsyncpa [#allocation3], 1
    %s456 = scalar_lea.sflag [#allocation3], 1
    %457 = vsyncpa %s456, 1
    %458 = vsyncpa [#allocation6], 1
    %459 = vsyncpa [#allocation4], 1
    %s460 = scalar_lea.sflag [#allocation4], 1
    %461 = vsyncpa %s460, 1

</llo_original>
